<compile_context>
chip_gen: v7x
topology: tpu7x:2x2x1
jax: 0.10.0
libtpu: 0.0.40
codegen_flags: <defaults>
</compile_context>

<pallas_src>
import functools

import jax
import jax.numpy as jnp
from jax.experimental import pallas as pl
from jax.experimental.pallas import tpu as pltpu


def _exposure_kernel(x_ref, out_ref, acc_ref, *, patch_size, inv_pool, mean_val):
    """Grid = (batch_group [parallel], half [parallel], row_tile [arbitrary]).

    x_ref  : (nb, C, tH, W) input block (nb packed batches, tH rows).
    out_ref: (1, 1, 8, 128) per-(group, half) partial; written once at finalize.
    acc_ref: (tH/P, W/P) f32 elementwise accumulator of squared diffs.
    """
    ti = pl.program_id(2)  # row-tile (streaming reduction) axis

    nb, _, th, w = x_ref.shape
    p = patch_size
    rows_p = th // p
    wp = w // p

    @pl.when(ti == 0)
    def _():
        acc_ref[...] = jnp.zeros_like(acc_ref)

    # Column-pool 0/1 selector generated in-kernel from 2-D iotas (no integer
    # division, no HBM/VMEM-resident constant, no extra DMA stream).
    col = jax.lax.broadcasted_iota(jnp.int32, (w, wp), 0)
    patch = jax.lax.broadcasted_iota(jnp.int32, (w, wp), 1)
    sel = ((col >= patch * p) & (col < (patch + 1) * p)).astype(jnp.float32)

    acc = acc_ref[...]
    # Static unroll over the (<=8) packed batches; all per-batch work is 2-D.
    for i in range(nb):
        # Channel sum, accumulated in f32 even for narrower input dtypes.
        ch_sum = jnp.sum(x_ref[i].astype(jnp.float32), axis=0)           # (tH, W)
        # Row pooling: pure sublane reshape-sum on the VPU (last dim untouched).
        row_sum = jnp.sum(ch_sum.reshape(rows_p, p, w), axis=1)          # (tH/P, W)
        # Column pooling: one small 0/1-selector matmul on the otherwise idle
        # MXU (Mosaic's f32 contraction is multi-pass; matches the f32
        # reference to ~1e-6 on test data).
        pooled = jnp.dot(row_sum, sel, preferred_element_type=jnp.float32)  # (tH/P, W/P)
        diff = pooled * jnp.float32(inv_pool) - jnp.float32(mean_val)
        acc = acc + diff * diff
    acc_ref[...] = acc

    @pl.when(ti == pl.num_programs(2) - 1)
    def _():
        s = jnp.sum(acc_ref[...])  # single cross-lane reduce per (group, half)
        out_ref[...] = jnp.broadcast_to(s, out_ref.shape).astype(out_ref.dtype)


def _pick_tiling(b, c, h, w, p, itemsize, budget_bytes, max_pack=8):
    """Byte-budget block sizing for an HBM-bound kernel.

    Returns (nb, th): either nb whole images packed per grid step (small-image
    case, th == h) or nb == 1 with a row slab of th rows (large-image case).
    th always divides h, is a multiple of patch_size, and is a multiple of 8
    (or the full H) so the (8, 128) block-layout rule holds.
    """
    image_bytes = c * h * w * itemsize
    if image_bytes <= budget_bytes:
        # Small images: pack whole batches to amortize the ~0.35us/step cost.
        nb_cap = min(b, max_pack, max(1, budget_bytes // image_bytes))
        nb = max(d for d in range(1, nb_cap + 1) if b % d == 0)
        return nb, h
    # Large images: one image per group; biggest legal row slab under budget.
    row_bytes = c * w * itemsize
    max_rows = max(p, budget_bytes // row_bytes)
    cands = [d for d in range(p, h + 1, p) if h % d == 0]
    good = [d for d in cands if d % 8 == 0 or d == h]  # (8,128) layout rule
    if good:
        cands = good
    under = [d for d in cands if d <= max_rows]
    return 1, (max(under) if under else min(cands))


def exposure_control_loss(x, patch_size, mean_val):
    """x: (B, C, H, W). Returns the scalar exposure-control loss (float32)."""
    b, c, h, w = x.shape
    p = int(patch_size)
    # TODO(synk): PyTorch AvgPool2d floor-drops ragged borders; exact divisibility assumed here.
    assert h % p == 0 and w % p == 0, "assume exact pooling"
    hp, wp = h // p, w // p

    itemsize = jnp.dtype(x.dtype).itemsize
    vmem_limit = 32 * 1024 * 1024  # explicit; safe on v5e/v6e (128 MiB) and v7x (64 MiB)
    sel_bytes = w * wp * 4         # in-kernel selector temporary
    # Per-buffer byte budget: leaves room for the double-buffered input block,
    # the (tH, W) f32 channel-sum temporary and the selector, with slack.
    budget = max(512 * 1024, min(4 * 1024 * 1024, (24 * 1024 * 1024 - sel_bytes) // 3))
    nb, th = _pick_tiling(b, c, h, w, p, itemsize, budget)

    n_bgroups = b // nb
    n_tiles = h // th
    # v7x has 2 TensorCores; if batch collapses to a single parallel group,
    # split the row-tile range into two parallel halves so both cores stream.
    n_halves = 2 if (n_bgroups == 1 and n_tiles >= 2 and n_tiles % 2 == 0) else 1
    tiles_per_half = n_tiles // n_halves

    inv_pool = 1.0 / float(c * p * p)
    kernel = functools.partial(
        _exposure_kernel, patch_size=p, inv_pool=inv_pool, mean_val=float(mean_val)
    )

    in_bytes = b * c * h * w * itemsize
    out_bytes = n_bgroups * n_halves * 8 * 128 * 4

    partials = pl.pallas_call(
        kernel,
        out_shape=jax.ShapeDtypeStruct((n_bgroups, n_halves, 8, 128), jnp.float32),
        grid_spec=pltpu.PrefetchScalarGridSpec(
            num_scalar_prefetch=0,
            grid=(n_bgroups, n_halves, tiles_per_half),
            in_specs=[
                # (nb, C, tH, W) image slab per step; W is always full width
                # (lane-dense), tH divides H and respects the sublane rule.
                pl.BlockSpec(
                    (nb, c, th, w),
                    lambda bg, hh, ti: (bg, 0, hh * tiles_per_half + ti, 0),
                ),
            ],
            # Lane-dense per-(group, half) partial; written only at finalize.
            out_specs=pl.BlockSpec((1, 1, 8, 128), lambda bg, hh, ti: (bg, hh, 0, 0)),
            scratch_shapes=[pltpu.VMEM((th // p, wp), jnp.float32)],
        ),
        compiler_params=pltpu.CompilerParams(
            dimension_semantics=("parallel", "parallel", "arbitrary"),
            vmem_limit_bytes=vmem_limit,
        ),
        cost_estimate=pl.CostEstimate(
            flops=2 * b * c * h * w,
            transcendentals=0,
            bytes_accessed=in_bytes + out_bytes,
        ),
    )(x)

    total = jnp.sum(partials[:, :, 0, 0])  # sum of squared diffs over everything
    return total / jnp.float32(b * hp * wp)


def _reference(x, patch_size, mean_val):
    xm = jnp.mean(x, axis=1, keepdims=True)                      # (B,1,H,W)
    bb, _, h, w = xm.shape
    p = patch_size
    pooled = jnp.mean(
        xm.reshape(bb, 1, h // p, p, w // p, p), axis=(3, 5)
    )                                                            # (B,1,H/p,W/p)
    return jnp.mean((pooled - mean_val) ** 2)


if __name__ == "__main__":
    key = jax.random.PRNGKey(0)
    B, C, H, W = 2, 4, 16, 16
    patch_size = 4
    mean_val = 0.6

    x = jax.random.uniform(key, (B, C, H, W), dtype=jnp.float32)

    out = exposure_control_loss(x, patch_size, mean_val)
    out = jax.block_until_ready(out)

    ref = _reference(x, patch_size, mean_val)
    assert jnp.allclose(out, ref, rtol=1e-5, atol=1e-6), (out, ref)

    print("KERNEL_OK")
</pallas_src>

<mosaic_0001>
module attributes {stable_mosaic.version = 11 : i64} {
  func.func @_exposure_kernel(%arg0: i32, %arg1: i32, %arg2: i32, %arg3: memref<2x4x16x16xf32, #tpu.memory_space<vmem>>, %arg4: memref<1x1x8x128xf32, #tpu.memory_space<vmem>>, %arg5: memref<4x4xf32, #tpu.memory_space<vmem>>) attributes {dimension_semantics = [#tpu.dimension_semantics<parallel>, #tpu.dimension_semantics<parallel>, #tpu.dimension_semantics<arbitrary>], iteration_bounds = array<i64: 1, 1, 1>, scalar_prefetch = 0 : i64, scratch_operands = 1 : i64, tpu.core_type = #tpu.core_type<tc>, window_params = [{transform_indices = @transform_0, window_bounds = array<i64: 2, 4, 16, 16>}, {transform_indices = @transform_1, window_bounds = array<i64: 1, 1, 8, 128>}]} {
    %c0_i32 = arith.constant 0 : i32
    %0 = arith.cmpi eq, %arg2, %c0_i32 : i32
    %1 = arith.extui %0 : i1 to i32
    %c0_i32_0 = arith.constant 0 : i32
    %2 = arith.cmpi ne, %1, %c0_i32_0 : i32
    scf.if %2 {
      %cst_23 = arith.constant 0.000000e+00 : f32
      %45 = vector.broadcast %cst_23 : f32 to vector<4x4xf32>
      %c0_24 = arith.constant 0 : index
      %c0_25 = arith.constant 0 : index
      %46 = vector.load %arg5[%c0_24, %c0_25] : memref<4x4xf32, #tpu.memory_space<vmem>>, vector<4x4xf32>
      tpu.vector_store %arg5[%c0_24, %c0_25], %45 {strides = array<i32>} : memref<4x4xf32, #tpu.memory_space<vmem>>, vector<4x4xf32>,
    } else {
    }
    %3 = tpu.iota {dimensions = array<i32: 0>} : vector<16x4xi32>
    %4 = tpu.iota {dimensions = array<i32: 1>} : vector<16x4xi32>
    %c4_i32 = arith.constant 4 : i32
    %5 = vector.broadcast %c4_i32 : i32 to vector<16x4xi32>
    %6 = arith.muli %4, %5 : vector<16x4xi32>
    %7 = arith.cmpi sge, %3, %6 : vector<16x4xi32>
    %c1_i32 = arith.constant 1 : i32
    %8 = vector.broadcast %c1_i32 : i32 to vector<16x4xi32>
    %9 = arith.addi %4, %8 : vector<16x4xi32>
    %c4_i32_1 = arith.constant 4 : i32
    %10 = vector.broadcast %c4_i32_1 : i32 to vector<16x4xi32>
    %11 = arith.muli %9, %10 : vector<16x4xi32>
    %12 = arith.cmpi slt, %3, %11 : vector<16x4xi32>
    %13 = arith.andi %7, %12 : vector<16x4xi1>
    %14 = arith.extui %13 : vector<16x4xi1> to vector<16x4xi32>
    %15 = arith.sitofp %14 : vector<16x4xi32> to vector<16x4xf32>
    %c0 = arith.constant 0 : index
    %c0_2 = arith.constant 0 : index
    %16 = vector.load %arg5[%c0, %c0_2] : memref<4x4xf32, #tpu.memory_space<vmem>>, vector<4x4xf32>
    %c0_3 = arith.constant 0 : index
    %c0_4 = arith.constant 0 : index
    %c0_5 = arith.constant 0 : index
    %c0_6 = arith.constant 0 : index
    %17 = vector.load %arg3[%c0_3, %c0_4, %c0_5, %c0_6] : memref<2x4x16x16xf32, #tpu.memory_space<vmem>>, vector<1x4x16x16xf32>
    %18 = vector.shape_cast %17 : vector<1x4x16x16xf32> to vector<4x16x16xf32>
    %cst = arith.constant dense<0.000000e+00> : vector<16x16xf32>
    %19 = vector.multi_reduction <add>, %18, %cst [0] : vector<4x16x16xf32> to vector<16x16xf32>
    %20 = vector.shape_cast %19 : vector<16x16xf32> to vector<4x4x16xf32>
    %cst_7 = arith.constant dense<0.000000e+00> : vector<4x16xf32>
    %21 = vector.multi_reduction <add>, %20, %cst_7 [1] : vector<4x4x16xf32> to vector<4x16xf32>
    %cst_8 = arith.constant dense<0.000000e+00> : vector<4x4xf32>
    %22 = tpu.matmul %21, %15, %cst_8 {dimension_numbers = #tpu.dot_dimension_numbers<[1], [0], [0], [1], [0, 0, 1, 1], [], []>} : vector<4x16xf32>, vector<16x4xf32>, vector<4x4xf32> -> vector<4x4xf32>
    %cst_9 = arith.constant 1.562500e-02 : f32
    %23 = vector.broadcast %cst_9 : f32 to vector<4x4xf32>
    %24 = arith.mulf %22, %23 : vector<4x4xf32>
    %cst_10 = arith.constant 6.000000e-01 : f32
    %25 = vector.broadcast %cst_10 : f32 to vector<4x4xf32>
    %26 = arith.subf %24, %25 : vector<4x4xf32>
    %27 = arith.mulf %26, %26 : vector<4x4xf32>
    %28 = arith.addf %16, %27 : vector<4x4xf32>
    %c1 = arith.constant 1 : index
    %c0_11 = arith.constant 0 : index
    %c0_12 = arith.constant 0 : index
    %c0_13 = arith.constant 0 : index
    %29 = vector.load %arg3[%c1, %c0_11, %c0_12, %c0_13] : memref<2x4x16x16xf32, #tpu.memory_space<vmem>>, vector<1x4x16x16xf32>
    %30 = vector.shape_cast %29 : vector<1x4x16x16xf32> to vector<4x16x16xf32>
    %cst_14 = arith.constant dense<0.000000e+00> : vector<16x16xf32>
    %31 = vector.multi_reduction <add>, %30, %cst_14 [0] : vector<4x16x16xf32> to vector<16x16xf32>
    %32 = vector.shape_cast %31 : vector<16x16xf32> to vector<4x4x16xf32>
    %cst_15 = arith.constant dense<0.000000e+00> : vector<4x16xf32>
    %33 = vector.multi_reduction <add>, %32, %cst_15 [1] : vector<4x4x16xf32> to vector<4x16xf32>
    %cst_16 = arith.constant dense<0.000000e+00> : vector<4x4xf32>
    %34 = tpu.matmul %33, %15, %cst_16 {dimension_numbers = #tpu.dot_dimension_numbers<[1], [0], [0], [1], [0, 0, 1, 1], [], []>} : vector<4x16xf32>, vector<16x4xf32>, vector<4x4xf32> -> vector<4x4xf32>
    %cst_17 = arith.constant 1.562500e-02 : f32
    %35 = vector.broadcast %cst_17 : f32 to vector<4x4xf32>
    %36 = arith.mulf %34, %35 : vector<4x4xf32>
    %cst_18 = arith.constant 6.000000e-01 : f32
    %37 = vector.broadcast %cst_18 : f32 to vector<4x4xf32>
    %38 = arith.subf %36, %37 : vector<4x4xf32>
    %39 = arith.mulf %38, %38 : vector<4x4xf32>
    %40 = arith.addf %28, %39 : vector<4x4xf32>
    %c0_19 = arith.constant 0 : index
    %c0_20 = arith.constant 0 : index
    %41 = vector.load %arg5[%c0_19, %c0_20] : memref<4x4xf32, #tpu.memory_space<vmem>>, vector<4x4xf32>
    tpu.vector_store %arg5[%c0_19, %c0_20], %40 {strides = array<i32>} : memref<4x4xf32, #tpu.memory_space<vmem>>, vector<4x4xf32>,
    %c0_i32_21 = arith.constant 0 : i32
    %42 = arith.cmpi eq, %arg2, %c0_i32_21 : i32
    %43 = arith.extui %42 : i1 to i32
    %c0_i32_22 = arith.constant 0 : i32
    %44 = arith.cmpi ne, %43, %c0_i32_22 : i32
    scf.if %44 {
      %c0_23 = arith.constant 0 : index
      %c0_24 = arith.constant 0 : index
      %45 = vector.load %arg5[%c0_23, %c0_24] : memref<4x4xf32, #tpu.memory_space<vmem>>, vector<4x4xf32>
      %46 = vector.shape_cast %45 : vector<4x4xf32> to vector<1x4x4xf32>
      %cst_25 = arith.constant dense<0.000000e+00> : vector<1xf32>
      %47 = vector.multi_reduction <add>, %46, %cst_25 [1, 2] : vector<1x4x4xf32> to vector<1xf32>
      %48 = vector.shape_cast %47 : vector<1xf32> to vector<1x1x1xf32>
      %49 = vector.extract %48[0, 0, 0] : f32 from vector<1x1x1xf32>
      %50 = vector.broadcast %49 : f32 to vector<1x1x8x128xf32>
      %c0_26 = arith.constant 0 : index
      %c0_27 = arith.constant 0 : index
      %c0_28 = arith.constant 0 : index
      %c0_29 = arith.constant 0 : index
      %51 = vector.load %arg4[%c0_26, %c0_27, %c0_28, %c0_29] : memref<1x1x8x128xf32, #tpu.memory_space<vmem>>, vector<1x1x8x128xf32>
      tpu.vector_store %arg4[%c0_26, %c0_27, %c0_28, %c0_29], %50 {strides = array<i32>} : memref<1x1x8x128xf32, #tpu.memory_space<vmem>>, vector<1x1x8x128xf32>,
    } else {
    }
    return
  }
  func.func @transform_0(%arg0: i32, %arg1: i32, %arg2: i32) -> (i32, i32, i32, i32) {
    %c1_i32 = arith.constant 1 : i32
    %0 = arith.muli %arg1, %c1_i32 : i32
    %1 = arith.addi %0, %arg2 : i32
    %c0_i32 = arith.constant 0 : i32
    %c0_i32_0 = arith.constant 0 : i32
    %c0_i32_1 = arith.constant 0 : i32
    return %arg0, %c0_i32, %1, %c0_i32_0 : i32, i32, i32, i32
  }
  func.func @transform_1(%arg0: i32, %arg1: i32, %arg2: i32) -> (i32, i32, i32, i32) {
    %c0_i32 = arith.constant 0 : i32
    %c0_i32_0 = arith.constant 0 : i32
    %c0_i32_1 = arith.constant 0 : i32
    return %arg0, %arg1, %c0_i32, %c0_i32_0 : i32, i32, i32, i32
  }
}

</mosaic_0001>

<llo_original>
// kernel: tpu_custom_call.1
$region0: #{tpu_custom_call.1}
  #allocation0 [shape = 'u32[]', space=smem, size = 0x4, offset = 0x4, fixed_abs, tag = 'smem constant byte address 0x4 - core index']
  #allocation1 [shape = 'u32[144,128]{1,0:T(1,128)}', space=vmem, size = 0x12000, scoped, tag = 'internal scratch']
  #allocation2 [shape = 'f32[4,4]{1,0:T(4,128)}', space=vmem, size = 0x800, scoped, tag = 'scratch operand']
  %s0 = inlined_call_operand.hbm [shape: f32[2,4,16,16], index: 0, kind: input, shape index: {}]
  %s1 = inlined_call_operand.hbm [shape: f32[1,1,8,128], index: 1, kind: output, shape index: {}]
  %s2 = sld [smem:[#allocation0]]
  $region26: #{tpu_custom_call.1} parent=0
    _
  %s4 = ssub.s32 1, %s2
  %s5 = scalar_select 0, %s4, %s2
  $region1: #{tpu_custom_call.1} parent=0
    #allocation3 [shape = 'u8[65536]{0}', space=vmem, size = 0x10000, scoped, tag = 'input window, operand 0, single buffered']
    #allocation4 [shape = 's32[1]{0}', space=sflag, size = 0x4, scoped, tag = 'scoped memory for tpu_custom_call.1']
    #allocation5 [shape = 's32[1]{0}', space=sflag, size = 0x4, scoped, tag = 'scoped memory for tpu_custom_call.1']
    #allocation6 [shape = 'u8[4096]{0}', space=vmem, size = 0x1000, scoped, tag = 'output window, operand 0, single buffered']
    %6 = vsyncpa [#allocation4], 0
    %7 = vsyncpa [#allocation5], 0
    // Predicated region
    $region2: #{tpu_custom_call.1} parent=1 // pred_check
      _
    $region3: #{tpu_custom_call.1} parent=1 // pred_check_branch
      %9 = sbr.rel (0) target = $region5
    $region4: #{tpu_custom_call.1} parent=1 // pred_region
      %s10 = sadd.s32 0, 0
      %s11 = smul.u32 2, %s10
      %s13 = ssub.s32 2048, 2048
      %14 = vsyncadd [#allocation4], %s13
      %s15 = smul.addr %s11, 128
      %s16 = scalar_lea.hbm %s0, %s15
      %s17 = sshll.u32 [#allocation3], 4
      %s18 = int_to_ptr.vmem [resolvable:$true] %s17
      %23 = dma.hbm_to_vmem [thread:$0]  %s16, 2048, %s18, [#allocation4], 128, 128, 8
    $region5: #{tpu_custom_call.1} parent=1 // pred_fallthru
      _
    // Predicated region
    $region6: #{tpu_custom_call.1} parent=1 // pred_check
      _
    $region7: #{tpu_custom_call.1} parent=1 // pred_check_branch
      %25 = sbr.rel (0) target = $region9
    $region8: #{tpu_custom_call.1} parent=1 // pred_region
      %26 = dma.done [#allocation4], 2048
    $region9: #{tpu_custom_call.1} parent=1 // pred_fallthru
      _
    %s27 = sadd.s32 0, 0
    %s28 = smul.u32 2, %s27
    %p29 = scmp.eq.s32.totalorder 0, 0
    // Predicated region
    $region10: #{tpu_custom_call.1} parent=1 // pred_check
      %p30 = pneg %p29
    $region11: #{tpu_custom_call.1} parent=1 // pred_check_branch
      %32 = sbr.rel (%p30) target = $region13
    $region12: #{tpu_custom_call.1} parent=1 // pred_region
      %vm33 = vcmask 27648
      %34 = vst.msk [vmem:[#allocation2] sm:$0xf] %vm33, 0.0
    $region13: #{tpu_custom_call.1} parent=1 // pred_fallthru
      _
    %v35 = vlaneseq
    %v36 = vshrl.u32 %v35, 7
    %v37 = vadd.s32 %v36, 8
    %v38 = vlaneseq
    %v39 = vand.u32 %v38, 127
    %v40 = vmul.u32 %v39, 4
    %vm41 = vcmp.ge.s32.totalorder %v36, %v40
    %vm42 = vcmp.ge.s32.totalorder %v37, %v40
    %v43 = vadd.s32 %v39, 1
    %v44 = vmul.u32 %v43, 4
    %vm45 = vcmp.lt.s32.totalorder %v36, %v44
    %vm46 = vcmp.lt.s32.totalorder %v37, %v44
    %vm47 = vmand %vm41, %vm45
    %vm48 = vmand %vm42, %vm46
    %v49 = vsel %vm47, 1, 0
    %v50 = vsel %vm48, 1, 0
    %v51 = vcvt.s32.f32 %v49
    %v52 = vcvt.s32.f32 %v50
    %v53 = vld [vmem:[#allocation2] sm:$0xf]
    %v54 = vld [vmem:[#allocation3] sm:$0xff]
    %v55 = vld [vmem:[#allocation3 + $0x8] sm:$0xff]
    %v56 = vld [vmem:[#allocation3 + $0x10] sm:$0xff]
    %v57 = vld [vmem:[#allocation3 + $0x18] sm:$0xff]
    %v58 = vld [vmem:[#allocation3 + $0x20] sm:$0xff]
    %v59 = vld [vmem:[#allocation3 + $0x28] sm:$0xff]
    %v60 = vld [vmem:[#allocation3 + $0x30] sm:$0xff]
    %v61 = vld [vmem:[#allocation3 + $0x38] sm:$0xff]
    %vm62 = vcmask 130048
    %v63 = vsel %vm62, %v54, 0.0
    %v64 = vsel %vm62, %v56, 0.0
    %v65 = vadd.f32 %v63, %v64
    %v66 = vsel %vm62, %v58, 0.0
    %v67 = vadd.f32 %v65, %v66
    %v68 = vsel %vm62, %v60, 0.0
    %v69 = vadd.f32 %v67, %v68
    %v70 = vsel %vm62, %v55, 0.0
    %v71 = vsel %vm62, %v57, 0.0
    %v72 = vadd.f32 %v70, %v71
    %v73 = vsel %vm62, %v59, 0.0
    %v74 = vadd.f32 %v72, %v73
    %v75 = vsel %vm62, %v61, 0.0
    %v76 = vadd.f32 %v74, %v75
    %v79 = vcombine.high %v69, %v69
    %v80 = vcombine.high %v76, %v76
    %vm83 = vcmask 125952
    %v84 = vsel %vm83, %v69, 0.0
    %v85 = vrot.slane %v84, 4
    %v86 = vadd.f32 %v84, %v85
    %v87 = vrot.slane %v86, 2
    %v88 = vadd.f32 %v86, %v87
    %v89 = vrot.slane %v88, 1
    %v90 = vadd.f32 %v88, %v89
    %v91 = vsel %vm83, %v79, 0.0
    %v92 = vrot.slane %v91, 4
    %v93 = vadd.f32 %v91, %v92
    %v94 = vrot.slane %v93, 2
    %v95 = vadd.f32 %v93, %v94
    %v96 = vrot.slane %v95, 1
    %v97 = vadd.f32 %v95, %v96
    %v98 = vsel %vm83, %v76, 0.0
    %v99 = vrot.slane %v98, 4
    %v100 = vadd.f32 %v98, %v99
    %v101 = vrot.slane %v100, 2
    %v102 = vadd.f32 %v100, %v101
    %v103 = vrot.slane %v102, 1
    %v104 = vadd.f32 %v102, %v103
    %v105 = vsel %vm83, %v80, 0.0
    %v106 = vrot.slane %v105, 4
    %v107 = vadd.f32 %v105, %v106
    %v108 = vrot.slane %v107, 2
    %v109 = vadd.f32 %v107, %v108
    %v110 = vrot.slane %v109, 1
    %v111 = vadd.f32 %v109, %v110
    %vm116 = vcmask 1041409
    %v117 = vsel %vm116, %v97, %v90
    %vm118 = vcmask 1042434
    %v119 = vsel %vm118, %v104, %v117
    %vm120 = vcmask 1043459
    %v121 = vsel %vm120, %v111, %v119
    %v122 = vsel %vm62, %v121, 0
    %124 = vmatprep.subr.mxu0 0.0
    %125 = vmatpush1.msra.mxu0 %v51
    %126 = vmatprep.subr.mxu0 0.0
    %127 = vmatpush1.msra.mxu0 %v52
    %128 = vmatprep.subr.mxu0 0.0
    %129 = vmatpush1.msra.mxu0 0.0
    %130 = vmatprep.subr.mxu0 0.0
    %131 = vmatpush1.msra.mxu0 0.0
    %132 = vmatprep.subr.mxu0 0.0
    %133 = vmatpush1.msra.mxu0 0.0
    %134 = vmatprep.subr.mxu0 0.0
    %135 = vmatpush1.msra.mxu0 0.0
    %136 = vmatprep.subr.mxu0 0.0
    %137 = vmatpush1.msra.mxu0 0.0
    %138 = vmatprep.subr.mxu0 0.0
    %139 = vmatpush1.msra.mxu0 0.0
    %140 = vmatprep.subr.mxu0 0.0
    %141 = vmatpush1.msra.mxu0 0.0
    %142 = vmatprep.subr.mxu0 0.0
    %143 = vmatpush1.msra.mxu0 0.0
    %144 = vmatprep.subr.mxu0 0.0
    %145 = vmatpush1.msra.mxu0 0.0
    %146 = vmatprep.subr.mxu0 0.0
    %147 = vmatpush1.msra.mxu0 0.0
    %148 = vmatprep.subr.mxu0 0.0
    %149 = vmatpush1.msra.mxu0 0.0
    %150 = vmatprep.subr.mxu0 0.0
    %151 = vmatpush1.msra.mxu0 0.0
    %152 = vmatprep.subr.mxu0 0.0
    %153 = vmatpush1.msra.mxu0 0.0
    %154 = vmatprep.subr.mxu0 0.0
    %155 = vmatpush1.msra.mxu0 0.0
    %156 = vmatprep.subr.mxu0 0.0
    %157 = vmatpush1.msra.mxu0 0.0
    %158 = vmatprep.subr.mxu0 0.0
    %159 = vmatpush1.msra.mxu0 0.0
    %160 = vmatprep.subr.mxu0 0.0
    %161 = vmatpush1.msra.mxu0 0.0
    %162 = vmatprep.subr.mxu0 0.0
    %163 = vmatpush1.msra.mxu0 0.0
    %164 = vmatprep.subr.mxu0 0.0
    %165 = vmatpush1.msra.mxu0 0.0
    %166 = vmatprep.subr.mxu0 0.0
    %167 = vmatpush1.msra.mxu0 0.0
    %168 = vmatprep.subr.mxu0 0.0
    %169 = vmatpush1.msra.mxu0 0.0
    %170 = vmatprep.subr.mxu0 0.0
    %171 = vmatpush1.msra.mxu0 0.0
    %172 = vmatprep.subr.mxu0 0.0
    %173 = vmatpush1.msra.mxu0 0.0
    %174 = vmatprep.subr.mxu0 0.0
    %175 = vmatpush1.msra.mxu0 0.0
    %176 = vmatprep.subr.mxu0 0.0
    %177 = vmatpush1.msra.mxu0 0.0
    %178 = vmatprep.subr.mxu0 0.0
    %179 = vmatpush1.msra.mxu0 0.0
    %180 = vmatprep.subr.mxu0 0.0
    %181 = vmatpush1.msra.mxu0 0.0
    %182 = vmatprep.subr.mxu0 0.0
    %183 = vmatpush1.msra.mxu0 0.0
    %184 = vmatprep.subr.mxu0 0.0
    %185 = vmatpush1.msra.mxu0 0.0
    %186 = vmatprep.subr.mxu0 0.0
    %187 = vmatpush1.msra.mxu0 0.0
    %188 = vmatprep.mubr.f32.mxu0 0.0
    %189 = vmatmul.mubr.f32.gmra.mrb[0].mxu0 %v122
    %v190 = vpop.f32.mrb[0].mxu0
    %v191 = vadd.f32 0.0, %v190
    %v192 = vpop.f32.mrb[0].mxu0
    %193 = vdwg.mxu0
    %v194 = vmul.f32 %v191, 0.015625
    %v195 = vsub.f32 %v194, 0.6
    %v196 = vmul.f32 %v195, %v195
    %v197 = vadd.f32 %v53, %v196
    %s198 = scalar_lea.vmem [#allocation3], 64
    %v199 = vld [vmem:[%s198] sm:$0xff]
    %v200 = vld [vmem:[%s198 + $0x8] sm:$0xff]
    %v201 = vld [vmem:[%s198 + $0x10] sm:$0xff]
    %v202 = vld [vmem:[%s198 + $0x18] sm:$0xff]
    %v203 = vld [vmem:[%s198 + $0x20] sm:$0xff]
    %v204 = vld [vmem:[%s198 + $0x28] sm:$0xff]
    %v205 = vld [vmem:[%s198 + $0x30] sm:$0xff]
    %v206 = vld [vmem:[%s198 + $0x38] sm:$0xff]
    %v207 = vsel %vm62, %v199, 0.0
    %v208 = vsel %vm62, %v201, 0.0
    %v209 = vadd.f32 %v207, %v208
    %v210 = vsel %vm62, %v203, 0.0
    %v211 = vadd.f32 %v209, %v210
    %v212 = vsel %vm62, %v205, 0.0
    %v213 = vadd.f32 %v211, %v212
    %v214 = vsel %vm62, %v200, 0.0
    %v215 = vsel %vm62, %v202, 0.0
    %v216 = vadd.f32 %v214, %v215
    %v217 = vsel %vm62, %v204, 0.0
    %v218 = vadd.f32 %v216, %v217
    %v219 = vsel %vm62, %v206, 0.0
    %v220 = vadd.f32 %v218, %v219
    %v223 = vcombine.high %v213, %v213
    %v224 = vcombine.high %v220, %v220
    %v227 = vsel %vm83, %v213, 0.0
    %v228 = vrot.slane %v227, 4
    %v229 = vadd.f32 %v227, %v228
    %v230 = vrot.slane %v229, 2
    %v231 = vadd.f32 %v229, %v230
    %v232 = vrot.slane %v231, 1
    %v233 = vadd.f32 %v231, %v232
    %v234 = vsel %vm83, %v223, 0.0
    %v235 = vrot.slane %v234, 4
    %v236 = vadd.f32 %v234, %v235
    %v237 = vrot.slane %v236, 2
    %v238 = vadd.f32 %v236, %v237
    %v239 = vrot.slane %v238, 1
    %v240 = vadd.f32 %v238, %v239
    %v241 = vsel %vm83, %v220, 0.0
    %v242 = vrot.slane %v241, 4
    %v243 = vadd.f32 %v241, %v242
    %v244 = vrot.slane %v243, 2
    %v245 = vadd.f32 %v243, %v244
    %v246 = vrot.slane %v245, 1
    %v247 = vadd.f32 %v245, %v246
    %v248 = vsel %vm83, %v224, 0.0
    %v249 = vrot.slane %v248, 4
    %v250 = vadd.f32 %v248, %v249
    %v251 = vrot.slane %v250, 2
    %v252 = vadd.f32 %v250, %v251
    %v253 = vrot.slane %v252, 1
    %v254 = vadd.f32 %v252, %v253
    %v259 = vsel %vm116, %v240, %v233
    %v260 = vsel %vm118, %v247, %v259
    %v261 = vsel %vm120, %v254, %v260
    %v262 = vsel %vm62, %v261, 0
    %264 = vmatprep.subr.mxu0 0.0
    %265 = vmatpush1.msra.mxu0 %v51
    %266 = vmatprep.subr.mxu0 0.0
    %267 = vmatpush1.msra.mxu0 %v52
    %268 = vmatprep.subr.mxu0 0.0
    %269 = vmatpush1.msra.mxu0 0.0
    %270 = vmatprep.subr.mxu0 0.0
    %271 = vmatpush1.msra.mxu0 0.0
    %272 = vmatprep.subr.mxu0 0.0
    %273 = vmatpush1.msra.mxu0 0.0
    %274 = vmatprep.subr.mxu0 0.0
    %275 = vmatpush1.msra.mxu0 0.0
    %276 = vmatprep.subr.mxu0 0.0
    %277 = vmatpush1.msra.mxu0 0.0
    %278 = vmatprep.subr.mxu0 0.0
    %279 = vmatpush1.msra.mxu0 0.0
    %280 = vmatprep.subr.mxu0 0.0
    %281 = vmatpush1.msra.mxu0 0.0
    %282 = vmatprep.subr.mxu0 0.0
    %283 = vmatpush1.msra.mxu0 0.0
    %284 = vmatprep.subr.mxu0 0.0
    %285 = vmatpush1.msra.mxu0 0.0
    %286 = vmatprep.subr.mxu0 0.0
    %287 = vmatpush1.msra.mxu0 0.0
    %288 = vmatprep.subr.mxu0 0.0
    %289 = vmatpush1.msra.mxu0 0.0
    %290 = vmatprep.subr.mxu0 0.0
    %291 = vmatpush1.msra.mxu0 0.0
    %292 = vmatprep.subr.mxu0 0.0
    %293 = vmatpush1.msra.mxu0 0.0
    %294 = vmatprep.subr.mxu0 0.0
    %295 = vmatpush1.msra.mxu0 0.0
    %296 = vmatprep.subr.mxu0 0.0
    %297 = vmatpush1.msra.mxu0 0.0
    %298 = vmatprep.subr.mxu0 0.0
    %299 = vmatpush1.msra.mxu0 0.0
    %300 = vmatprep.subr.mxu0 0.0
    %301 = vmatpush1.msra.mxu0 0.0
    %302 = vmatprep.subr.mxu0 0.0
    %303 = vmatpush1.msra.mxu0 0.0
    %304 = vmatprep.subr.mxu0 0.0
    %305 = vmatpush1.msra.mxu0 0.0
    %306 = vmatprep.subr.mxu0 0.0
    %307 = vmatpush1.msra.mxu0 0.0
    %308 = vmatprep.subr.mxu0 0.0
    %309 = vmatpush1.msra.mxu0 0.0
    %310 = vmatprep.subr.mxu0 0.0
    %311 = vmatpush1.msra.mxu0 0.0
    %312 = vmatprep.subr.mxu0 0.0
    %313 = vmatpush1.msra.mxu0 0.0
    %314 = vmatprep.subr.mxu0 0.0
    %315 = vmatpush1.msra.mxu0 0.0
    %316 = vmatprep.subr.mxu0 0.0
    %317 = vmatpush1.msra.mxu0 0.0
    %318 = vmatprep.subr.mxu0 0.0
    %319 = vmatpush1.msra.mxu0 0.0
    %320 = vmatprep.subr.mxu0 0.0
    %321 = vmatpush1.msra.mxu0 0.0
    %322 = vmatprep.subr.mxu0 0.0
    %323 = vmatpush1.msra.mxu0 0.0
    %324 = vmatprep.subr.mxu0 0.0
    %325 = vmatpush1.msra.mxu0 0.0
    %326 = vmatprep.subr.mxu0 0.0
    %327 = vmatpush1.msra.mxu0 0.0
    %328 = vmatprep.mubr.f32.mxu0 0.0
    %329 = vmatmul.mubr.f32.gmra.mrb[0].mxu0 %v262
    %v330 = vpop.f32.mrb[0].mxu0
    %v331 = vadd.f32 0.0, %v330
    %v332 = vpop.f32.mrb[0].mxu0
    %333 = vdwg.mxu0
    %v334 = vmul.f32 %v331, 0.015625
    %v335 = vsub.f32 %v334, 0.6
    %v336 = vmul.f32 %v335, %v335
    %v337 = vadd.f32 %v197, %v336
    %vm338 = vcmask 27648
    %339 = vst.msk [vmem:[#allocation2] sm:$0xf] %vm338, %v337
    // Predicated region
    $region14: #{tpu_custom_call.1} parent=1 // pred_check
      %p340 = pneg %p29
    $region15: #{tpu_custom_call.1} parent=1 // pred_check_branch
      %342 = sbr.rel (%p340) target = $region17
    $region16: #{tpu_custom_call.1} parent=1 // pred_region
      %v343 = vld [vmem:[#allocation2] sm:$0xf]
      %v344 = vsel %vm338, %v343, 0.0
      %345 = vadd.xlane.f32.xlu0 %v344
      %v346 = vpop.xlane.xlu0 %345
      %v347 = vrot.slane %v346, 4
      %v348 = vadd.f32 %v346, %v347
      %v349 = vrot.slane %v348, 2
      %v350 = vadd.f32 %v348, %v349
      %v351 = vrot.slane %v350, 1
      %v352 = vadd.f32 %v350, %v351
      %s353 = vtos %v352
      %v354 = vstv %s353
      %355 = vst [vmem:[#allocation6] sm:$0xff] %v354
    $region17: #{tpu_custom_call.1} parent=1 // pred_fallthru
      _
    // Predicated region
    $region18: #{tpu_custom_call.1} parent=1 // pred_check
      _
    $region19: #{tpu_custom_call.1} parent=1 // pred_check_branch
      %357 = sbr.rel (0) target = $region21
    $region20: #{tpu_custom_call.1} parent=1 // pred_region
      %s359 = ssub.s32 128, 128
      %360 = vsyncadd [#allocation5], %s359
      %s362 = sshll.u32 [#allocation6], 4
      %s363 = int_to_ptr.vmem [resolvable:$true] %s362
      %365 = dma.vmem_to_hbm [thread:$0]  %s363, 128, %s1, [#allocation5]
    $region21: #{tpu_custom_call.1} parent=1 // pred_fallthru
      _
    // Predicated region
    $region22: #{tpu_custom_call.1} parent=1 // pred_check
      _
    $region23: #{tpu_custom_call.1} parent=1 // pred_check_branch
      %367 = sbr.rel (0) target = $region25
    $region24: #{tpu_custom_call.1} parent=1 // pred_region
      %368 = dma.done [#allocation5], 128
    $region25: #{tpu_custom_call.1} parent=1 // pred_fallthru
      _
    %369 = vsyncpa [#allocation4], 1
    %370 = vsyncpa [#allocation5], 1

</llo_original>
